<compile_context>
chip_gen: v6e
topology: v6e:2x2x1
jax: 0.10.0
libtpu: 0.0.40
codegen_flags: <defaults>
</compile_context>

<pallas_src>
import numpy as np
import jax
import jax.numpy as jnp
from jax.experimental import pallas as pl
from jax.experimental.pallas import tpu as pltpu

# ----------------------------- model sizes ---------------------------------
C_IN = 3        # xyz
H1 = 64
H2 = 128
H3 = 128        # global feature size
K = 8           # number of keypoints
OUT_PAD = 128   # lane-dense padded head width (>= K*3)

TILE_P = 128    # points per grid step (re-derive per chip for huge N)
N_POINTS = 512  # toy size; must be a multiple of TILE_P
BATCH = 2


# ----------------------------- Pallas kernel --------------------------------
def _keypoint_kernel(x_ref, w1_ref, b1_ref, w2_ref, b2_ref,
                     w3_ref, b3_ref, w4_ref, b4_ref, out_ref, gmax_ref):
    # x_ref: (TILE_P, 3) f32 — one point tile of one batch.
    # w2/w3/w4 refs are bf16 (host-cast, resident); biases f32.
    # gmax_ref: (1, H3) f32 running per-batch max accumulator (VMEM scratch).
    t = pl.program_id(1)

    @pl.when(t == 0)
    def _():
        gmax_ref[...] = jnp.full_like(gmax_ref, -jnp.inf)

    # Layer 1 (3 -> H1): contraction dim is only 3, so three broadcast FMAs
    # on the VPU; read only the 3 used lane columns directly from the ref.
    w1 = w1_ref[...]                                        # (3, H1)
    h = (x_ref[:, 0:1] * w1[0:1, :]
         + x_ref[:, 1:2] * w1[1:2, :]
         + x_ref[:, 2:3] * w1[2:3, :]
         + b1_ref[...])
    h = jnp.maximum(h, 0.0)                                 # (TILE_P, H1) f32

    # Layers 2-3 (H1 -> H2 -> H3): MXU matmuls, bf16 operands / f32 accum.
    h = jnp.dot(h.astype(jnp.bfloat16), w2_ref[...],
                preferred_element_type=jnp.float32) + b2_ref[...]
    h = jnp.maximum(h, 0.0)                                 # (TILE_P, H2)
    h = jnp.dot(h.astype(jnp.bfloat16), w3_ref[...],
                preferred_element_type=jnp.float32) + b3_ref[...]
    h = jnp.maximum(h, 0.0)                                 # (TILE_P, H3)

    # Running global max over the point axis (cross-sublane XLU reduce).
    gmax_ref[...] = jnp.maximum(gmax_ref[...],
                                jnp.max(h, axis=0, keepdims=True))

    # Last point tile of this batch: regression head + lane-dense store.
    @pl.when(t == pl.num_programs(1) - 1)
    def _():
        g = gmax_ref[...]                                   # (1, H3)
        out_ref[...] = (jnp.dot(g.astype(jnp.bfloat16), w4_ref[...],
                                preferred_element_type=jnp.float32)
                        + b4_ref[...])                      # (1, OUT_PAD)


def keypoint_detector_pallas(pc_bnc, params, *, tile_p=TILE_P):
    """pc_bnc: (B, N, 3) float32 point cloud (channels-last layout)."""
    B, N, C = pc_bnc.shape
    assert C == C_IN
    # TODO(synk): pad ragged N to a multiple of tile_p (pad points with -inf
    # features or mask before the max-pool); toy sizes here divide evenly.
    assert N % tile_p == 0
    nt = N // tile_p
    w1, b1, w2, b2, w3, b3, w4, b4 = params

    # Host-side, one-time prep: bf16 weights for the MXU layers, lane-padded
    # head (padding columns are zero and sliced off after the kernel).
    w2b = w2.astype(jnp.bfloat16)
    w3b = w3.astype(jnp.bfloat16)
    w4p = (jnp.zeros((H3, OUT_PAD), jnp.float32)
           .at[:, : K * 3].set(w4).astype(jnp.bfloat16))
    b4p = jnp.zeros((1, OUT_PAD), jnp.float32).at[:, : K * 3].set(b4)

    def resident(shape):
        # Whole-array block, constant index -> DMA'd once, stays in VMEM.
        return pl.BlockSpec(shape, lambda b, t: (0, 0))

    flops = 2 * B * N * (C_IN * H1 + H1 * H2 + H2 * H3) + 2 * B * H3 * OUT_PAD
    bytes_accessed = (4 * pc_bnc.size
                      + 4 * (w1.size + b1.size + b2.size + b3.size + b4p.size)
                      + 2 * (w2b.size + w3b.size + w4p.size)
                      + 4 * B * OUT_PAD)

    out_pad = pl.pallas_call(
        _keypoint_kernel,
        out_shape=jax.ShapeDtypeStruct((B, 1, OUT_PAD), jnp.float32),
        grid_spec=pltpu.PrefetchScalarGridSpec(
            num_scalar_prefetch=0,
            grid=(B, nt),                                   # point tiles innermost
            in_specs=[
                # streamed point tile: (None, tile_p, 3) -> kernel sees (tile_p, 3)
                pl.BlockSpec((None, tile_p, C_IN), lambda b, t: (b, t, 0)),
                resident((C_IN, H1)), resident((1, H1)),
                resident((H1, H2)),   resident((1, H2)),
                resident((H2, H3)),   resident((1, H3)),
                resident((H3, OUT_PAD)), resident((1, OUT_PAD)),
            ],
            # Same output block across the point axis -> resident accumulator,
            # written only on the last tile of each batch.
            out_specs=pl.BlockSpec((None, 1, OUT_PAD), lambda b, t: (b, 0, 0)),
            scratch_shapes=[pltpu.VMEM((1, H3), jnp.float32)],
        ),
        compiler_params=pltpu.CompilerParams(
            dimension_semantics=("parallel", "arbitrary")),
        cost_estimate=pl.CostEstimate(flops=flops, transcendentals=0,
                                      bytes_accessed=bytes_accessed),
    )(pc_bnc, w1, b1, w2b, b2, w3b, b3, w4p, b4p)

    return out_pad[:, 0, : K * 3].reshape(B, K, 3)          # keypoints (B, K, 3)


# ----------------------------- ModelWrapper ---------------------------------
class ModelWrapper:
    """JAX/Pallas analogue of casper3d.keypoint_detector.ModelWrapper."""

    def __init__(self, model_impl):
        self.model_impl = model_impl

    def __call__(self, data):
        pc = data[0]
        if isinstance(pc, np.ndarray):
            pc = jnp.asarray(pc, dtype=jnp.float32)
        pc = pc.astype(jnp.float32)
        # PyTorch: pc.transpose(1, 2) -> (B, 3, N) for Conv1d (NCW), then
        # .cuda().  The Pallas model consumes channels-last (B, N, 3), which
        # is the identical computation for kernel-size-1 convolutions, so the
        # transpose is absorbed into the kernel layout (no data movement);
        # the device move is implicit on TPU.
        return self.model_impl(pc)


# ----------------------------- params + reference ---------------------------
def make_params(key):
    ks = jax.random.split(key, 4)

    def lin(k, fan_in, shape):
        return jax.random.normal(k, shape, jnp.float32) / np.sqrt(fan_in)

    w1 = lin(ks[0], C_IN, (C_IN, H1)); b1 = jnp.zeros((1, H1), jnp.float32)
    w2 = lin(ks[1], H1, (H1, H2));     b2 = jnp.zeros((1, H2), jnp.float32)
    w3 = lin(ks[2], H2, (H2, H3));     b3 = jnp.zeros((1, H3), jnp.float32)
    w4 = lin(ks[3], H3, (H3, K * 3));  b4 = jnp.zeros((1, K * 3), jnp.float32)
    return (w1, b1, w2, b2, w3, b3, w4, b4)


def reference_model(pc_bnc, params):
    """Pure-JAX reference (matching bf16-operand / f32-accum MXU layers)."""
    w1, b1, w2, b2, w3, b3, w4, b4 = params
    B, N, C = pc_bnc.shape
    x = pc_bnc.reshape(B * N, C)
    h = jnp.maximum(x @ w1 + b1, 0.0)
    h = jnp.maximum(jnp.dot(h.astype(jnp.bfloat16), w2.astype(jnp.bfloat16),
                            preferred_element_type=jnp.float32) + b2, 0.0)
    h = jnp.maximum(jnp.dot(h.astype(jnp.bfloat16), w3.astype(jnp.bfloat16),
                            preferred_element_type=jnp.float32) + b3, 0.0)
    g = jnp.max(h.reshape(B, N, H3), axis=1)                # (B, H3)
    out = jnp.dot(g.astype(jnp.bfloat16), w4.astype(jnp.bfloat16),
                  preferred_element_type=jnp.float32) + b4
    return out.reshape(B, K, 3)


if __name__ == "__main__":
    key = jax.random.PRNGKey(0)
    k_pc, k_par = jax.random.split(key)

    pc = jax.random.normal(k_pc, (BATCH, N_POINTS, C_IN), jnp.float32)
    params = make_params(k_par)

    model_impl = lambda x: keypoint_detector_pallas(x, params)
    wrapper = ModelWrapper(model_impl)

    # data is a tuple whose first element is the point cloud (numpy, like the
    # original PyTorch wrapper expects).
    data = (np.asarray(pc), None)
    out = wrapper(data)
    out = jax.block_until_ready(out)

    ref = reference_model(pc, params)
    assert out.shape == (BATCH, K, 3)
    # bf16 MXU operands (f32 accumulation) in both kernel and reference;
    # tolerance covers bf16 rounding-order differences.
    np.testing.assert_allclose(np.asarray(out), np.asarray(ref),
                               rtol=2e-2, atol=2e-2)
    print("KERNEL_OK")
</pallas_src>

<mosaic_0001>
module attributes {stable_mosaic.version = 11 : i64} {
  func.func @_keypoint_kernel(%arg0: i32, %arg1: i32, %arg2: memref<1x128x3xf32, #tpu.memory_space<vmem>>, %arg3: memref<3x64xf32, #tpu.memory_space<vmem>>, %arg4: memref<1x64xf32, #tpu.memory_space<vmem>>, %arg5: memref<64x128xbf16, #tpu.memory_space<vmem>>, %arg6: memref<1x128xf32, #tpu.memory_space<vmem>>, %arg7: memref<128x128xbf16, #tpu.memory_space<vmem>>, %arg8: memref<1x128xf32, #tpu.memory_space<vmem>>, %arg9: memref<128x128xbf16, #tpu.memory_space<vmem>>, %arg10: memref<1x128xf32, #tpu.memory_space<vmem>>, %arg11: memref<1x1x128xf32, #tpu.memory_space<vmem>>, %arg12: memref<1x128xf32, #tpu.memory_space<vmem>>) attributes {dimension_semantics = [#tpu.dimension_semantics<parallel>, #tpu.dimension_semantics<arbitrary>], iteration_bounds = array<i64: 2, 4>, scalar_prefetch = 0 : i64, scratch_operands = 1 : i64, tpu.core_type = #tpu.core_type<tc>, window_params = [{transform_indices = @transform_0, window_bounds = array<i64: 1, 128, 3>}, {pipeline_mode = #tpu.pipeline_mode<synchronous>, transform_indices = @transform_1, window_bounds = array<i64: 3, 64>}, {pipeline_mode = #tpu.pipeline_mode<synchronous>, transform_indices = @transform_2, window_bounds = array<i64: 1, 64>}, {pipeline_mode = #tpu.pipeline_mode<synchronous>, transform_indices = @transform_3, window_bounds = array<i64: 64, 128>}, {pipeline_mode = #tpu.pipeline_mode<synchronous>, transform_indices = @transform_4, window_bounds = array<i64: 1, 128>}, {pipeline_mode = #tpu.pipeline_mode<synchronous>, transform_indices = @transform_5, window_bounds = array<i64: 128, 128>}, {pipeline_mode = #tpu.pipeline_mode<synchronous>, transform_indices = @transform_6, window_bounds = array<i64: 1, 128>}, {pipeline_mode = #tpu.pipeline_mode<synchronous>, transform_indices = @transform_7, window_bounds = array<i64: 128, 128>}, {pipeline_mode = #tpu.pipeline_mode<synchronous>, transform_indices = @transform_8, window_bounds = array<i64: 1, 128>}, {transform_indices = @transform_9, window_bounds = array<i64: 1, 1, 128>}]} {
    %c0_i32 = arith.constant 0 : i32
    %0 = arith.cmpi eq, %arg1, %c0_i32 : i32
    %1 = arith.extui %0 : i1 to i32
    %c0_i32_0 = arith.constant 0 : i32
    %2 = arith.cmpi ne, %1, %c0_i32_0 : i32
    scf.if %2 {
      %cst_29 = arith.constant 0xFF800000 : f32
      %53 = vector.broadcast %cst_29 : f32 to vector<1x128xf32>
      %c0_30 = arith.constant 0 : index
      %c0_31 = arith.constant 0 : index
      %54 = vector.load %arg12[%c0_30, %c0_31] : memref<1x128xf32, #tpu.memory_space<vmem>>, vector<1x128xf32>
      tpu.vector_store %arg12[%c0_30, %c0_31], %53 {strides = array<i32>} : memref<1x128xf32, #tpu.memory_space<vmem>>, vector<1x128xf32>,
    } else {
    }
    %c0 = arith.constant 0 : index
    %c0_1 = arith.constant 0 : index
    %3 = vector.load %arg3[%c0, %c0_1] : memref<3x64xf32, #tpu.memory_space<vmem>>, vector<3x64xf32>
    %c0_2 = arith.constant 0 : index
    %c0_3 = arith.constant 0 : index
    %c0_4 = arith.constant 0 : index
    %4 = vector.load %arg2[%c0_2, %c0_3, %c0_4] : memref<1x128x3xf32, #tpu.memory_space<vmem>>, vector<1x128x1xf32>
    %5 = vector.shape_cast %4 : vector<1x128x1xf32> to vector<128x1xf32>
    %6 = vector.extract_strided_slice %3 {offsets = [0, 0], sizes = [1, 64], strides = [1, 1]} : vector<3x64xf32> to vector<1x64xf32>
    %7 = vector.broadcast %5 : vector<128x1xf32> to vector<128x64xf32>
    %8 = vector.broadcast %6 : vector<1x64xf32> to vector<128x64xf32>
    %9 = arith.mulf %7, %8 : vector<128x64xf32>
    %c0_5 = arith.constant 0 : index
    %c0_6 = arith.constant 0 : index
    %c1 = arith.constant 1 : index
    %10 = vector.load %arg2[%c0_5, %c0_6, %c1] : memref<1x128x3xf32, #tpu.memory_space<vmem>>, vector<1x128x1xf32>
    %11 = vector.shape_cast %10 : vector<1x128x1xf32> to vector<128x1xf32>
    %12 = vector.extract_strided_slice %3 {offsets = [1, 0], sizes = [1, 64], strides = [1, 1]} : vector<3x64xf32> to vector<1x64xf32>
    %13 = vector.broadcast %11 : vector<128x1xf32> to vector<128x64xf32>
    %14 = vector.broadcast %12 : vector<1x64xf32> to vector<128x64xf32>
    %15 = arith.mulf %13, %14 : vector<128x64xf32>
    %16 = arith.addf %9, %15 : vector<128x64xf32>
    %c0_7 = arith.constant 0 : index
    %c0_8 = arith.constant 0 : index
    %c2 = arith.constant 2 : index
    %17 = vector.load %arg2[%c0_7, %c0_8, %c2] : memref<1x128x3xf32, #tpu.memory_space<vmem>>, vector<1x128x1xf32>
    %18 = vector.shape_cast %17 : vector<1x128x1xf32> to vector<128x1xf32>
    %19 = vector.extract_strided_slice %3 {offsets = [2, 0], sizes = [1, 64], strides = [1, 1]} : vector<3x64xf32> to vector<1x64xf32>
    %20 = vector.broadcast %18 : vector<128x1xf32> to vector<128x64xf32>
    %21 = vector.broadcast %19 : vector<1x64xf32> to vector<128x64xf32>
    %22 = arith.mulf %20, %21 : vector<128x64xf32>
    %23 = arith.addf %16, %22 : vector<128x64xf32>
    %c0_9 = arith.constant 0 : index
    %c0_10 = arith.constant 0 : index
    %24 = vector.load %arg4[%c0_9, %c0_10] : memref<1x64xf32, #tpu.memory_space<vmem>>, vector<1x64xf32>
    %25 = vector.broadcast %24 : vector<1x64xf32> to vector<128x64xf32>
    %26 = arith.addf %23, %25 : vector<128x64xf32>
    %cst = arith.constant 0.000000e+00 : f32
    %27 = vector.broadcast %cst : f32 to vector<128x64xf32>
    %28 = arith.maximumf %26, %27 : vector<128x64xf32>
    %29 = arith.truncf %28 : vector<128x64xf32> to vector<128x64xbf16>
    %c0_11 = arith.constant 0 : index
    %c0_12 = arith.constant 0 : index
    %30 = vector.load %arg5[%c0_11, %c0_12] : memref<64x128xbf16, #tpu.memory_space<vmem>>, vector<64x128xbf16>
    %cst_13 = arith.constant dense<0.000000e+00> : vector<128x128xf32>
    %31 = tpu.matmul %29, %30, %cst_13 {dimension_numbers = #tpu.dot_dimension_numbers<[1], [0], [0], [1], [0, 0, 1, 1], [], []>} : vector<128x64xbf16>, vector<64x128xbf16>, vector<128x128xf32> -> vector<128x128xf32>
    %c0_14 = arith.constant 0 : index
    %c0_15 = arith.constant 0 : index
    %32 = vector.load %arg6[%c0_14, %c0_15] : memref<1x128xf32, #tpu.memory_space<vmem>>, vector<1x128xf32>
    %33 = vector.broadcast %32 : vector<1x128xf32> to vector<128x128xf32>
    %34 = arith.addf %31, %33 : vector<128x128xf32>
    %cst_16 = arith.constant 0.000000e+00 : f32
    %35 = vector.broadcast %cst_16 : f32 to vector<128x128xf32>
    %36 = arith.maximumf %34, %35 : vector<128x128xf32>
    %37 = arith.truncf %36 : vector<128x128xf32> to vector<128x128xbf16>
    %c0_17 = arith.constant 0 : index
    %c0_18 = arith.constant 0 : index
    %38 = vector.load %arg7[%c0_17, %c0_18] : memref<128x128xbf16, #tpu.memory_space<vmem>>, vector<128x128xbf16>
    %cst_19 = arith.constant dense<0.000000e+00> : vector<128x128xf32>
    %39 = tpu.matmul %37, %38, %cst_19 {dimension_numbers = #tpu.dot_dimension_numbers<[1], [0], [0], [1], [0, 0, 1, 1], [], []>} : vector<128x128xbf16>, vector<128x128xbf16>, vector<128x128xf32> -> vector<128x128xf32>
    %c0_20 = arith.constant 0 : index
    %c0_21 = arith.constant 0 : index
    %40 = vector.load %arg8[%c0_20, %c0_21] : memref<1x128xf32, #tpu.memory_space<vmem>>, vector<1x128xf32>
    %41 = vector.broadcast %40 : vector<1x128xf32> to vector<128x128xf32>
    %42 = arith.addf %39, %41 : vector<128x128xf32>
    %cst_22 = arith.constant 0.000000e+00 : f32
    %43 = vector.broadcast %cst_22 : f32 to vector<128x128xf32>
    %44 = arith.maximumf %42, %43 : vector<128x128xf32>
    %c0_23 = arith.constant 0 : index
    %c0_24 = arith.constant 0 : index
    %45 = vector.load %arg12[%c0_23, %c0_24] : memref<1x128xf32, #tpu.memory_space<vmem>>, vector<1x128xf32>
    %cst_25 = arith.constant dense<0xFF800000> : vector<128xf32>
    %46 = vector.multi_reduction <maximumf>, %44, %cst_25 [0] : vector<128x128xf32> to vector<128xf32>
    %47 = vector.shape_cast %46 : vector<128xf32> to vector<1x128xf32>
    %48 = arith.maximumf %45, %47 : vector<1x128xf32>
    %c0_26 = arith.constant 0 : index
    %c0_27 = arith.constant 0 : index
    %49 = vector.load %arg12[%c0_26, %c0_27] : memref<1x128xf32, #tpu.memory_space<vmem>>, vector<1x128xf32>
    tpu.vector_store %arg12[%c0_26, %c0_27], %48 {strides = array<i32>} : memref<1x128xf32, #tpu.memory_space<vmem>>, vector<1x128xf32>,
    %c3_i32 = arith.constant 3 : i32
    %50 = arith.cmpi eq, %arg1, %c3_i32 : i32
    %51 = arith.extui %50 : i1 to i32
    %c0_i32_28 = arith.constant 0 : i32
    %52 = arith.cmpi ne, %51, %c0_i32_28 : i32
    scf.if %52 {
      %c0_29 = arith.constant 0 : index
      %c0_30 = arith.constant 0 : index
      %53 = vector.load %arg12[%c0_29, %c0_30] : memref<1x128xf32, #tpu.memory_space<vmem>>, vector<1x128xf32>
      %54 = arith.truncf %53 : vector<1x128xf32> to vector<1x128xbf16>
      %c0_31 = arith.constant 0 : index
      %c0_32 = arith.constant 0 : index
      %55 = vector.load %arg9[%c0_31, %c0_32] : memref<128x128xbf16, #tpu.memory_space<vmem>>, vector<128x128xbf16>
      %cst_33 = arith.constant dense<0.000000e+00> : vector<1x128xf32>
      %56 = tpu.matmul %54, %55, %cst_33 {dimension_numbers = #tpu.dot_dimension_numbers<[1], [0], [0], [1], [0, 0, 1, 1], [], []>} : vector<1x128xbf16>, vector<128x128xbf16>, vector<1x128xf32> -> vector<1x128xf32>
      %c0_34 = arith.constant 0 : index
      %c0_35 = arith.constant 0 : index
      %57 = vector.load %arg10[%c0_34, %c0_35] : memref<1x128xf32, #tpu.memory_space<vmem>>, vector<1x128xf32>
      %58 = arith.addf %56, %57 : vector<1x128xf32>
      %c0_36 = arith.constant 0 : index
      %c0_37 = arith.constant 0 : index
      %c0_38 = arith.constant 0 : index
      %59 = vector.load %arg11[%c0_36, %c0_37, %c0_38] : memref<1x1x128xf32, #tpu.memory_space<vmem>>, vector<1x1x128xf32>
      %60 = vector.shape_cast %59 : vector<1x1x128xf32> to vector<1x128xf32>
      %61 = vector.shape_cast %58 : vector<1x128xf32> to vector<1x1x128xf32>
      tpu.vector_store %arg11[%c0_36, %c0_37, %c0_38], %61 {strides = array<i32>} : memref<1x1x128xf32, #tpu.memory_space<vmem>>, vector<1x1x128xf32>,
    } else {
    }
    return
  }
  func.func @transform_0(%arg0: i32, %arg1: i32) -> (i32, i32, i32) {
    %c0_i32 = arith.constant 0 : i32
    %c0_i32_0 = arith.constant 0 : i32
    return %arg0, %arg1, %c0_i32 : i32, i32, i32
  }
  func.func @transform_1(%arg0: i32, %arg1: i32) -> (i32, i32) {
    %c0_i32 = arith.constant 0 : i32
    %c0_i32_0 = arith.constant 0 : i32
    %c0_i32_1 = arith.constant 0 : i32
    return %c0_i32, %c0_i32_0 : i32, i32
  }
  func.func @transform_2(%arg0: i32, %arg1: i32) -> (i32, i32) {
    %c0_i32 = arith.constant 0 : i32
    %c0_i32_0 = arith.constant 0 : i32
    %c0_i32_1 = arith.constant 0 : i32
    return %c0_i32, %c0_i32_0 : i32, i32
  }
  func.func @transform_3(%arg0: i32, %arg1: i32) -> (i32, i32) {
    %c0_i32 = arith.constant 0 : i32
    %c0_i32_0 = arith.constant 0 : i32
    %c0_i32_1 = arith.constant 0 : i32
    return %c0_i32, %c0_i32_0 : i32, i32
  }
  func.func @transform_4(%arg0: i32, %arg1: i32) -> (i32, i32) {
    %c0_i32 = arith.constant 0 : i32
    %c0_i32_0 = arith.constant 0 : i32
    %c0_i32_1 = arith.constant 0 : i32
    return %c0_i32, %c0_i32_0 : i32, i32
  }
  func.func @transform_5(%arg0: i32, %arg1: i32) -> (i32, i32) {
    %c0_i32 = arith.constant 0 : i32
    %c0_i32_0 = arith.constant 0 : i32
    %c0_i32_1 = arith.constant 0 : i32
    return %c0_i32, %c0_i32_0 : i32, i32
  }
  func.func @transform_6(%arg0: i32, %arg1: i32) -> (i32, i32) {
    %c0_i32 = arith.constant 0 : i32
    %c0_i32_0 = arith.constant 0 : i32
    %c0_i32_1 = arith.constant 0 : i32
    return %c0_i32, %c0_i32_0 : i32, i32
  }
  func.func @transform_7(%arg0: i32, %arg1: i32) -> (i32, i32) {
    %c0_i32 = arith.constant 0 : i32
    %c0_i32_0 = arith.constant 0 : i32
    %c0_i32_1 = arith.constant 0 : i32
    return %c0_i32, %c0_i32_0 : i32, i32
  }
  func.func @transform_8(%arg0: i32, %arg1: i32) -> (i32, i32) {
    %c0_i32 = arith.constant 0 : i32
    %c0_i32_0 = arith.constant 0 : i32
    %c0_i32_1 = arith.constant 0 : i32
    return %c0_i32, %c0_i32_0 : i32, i32
  }
  func.func @transform_9(%arg0: i32, %arg1: i32) -> (i32, i32, i32) {
    %c0_i32 = arith.constant 0 : i32
    %c0_i32_0 = arith.constant 0 : i32
    %c0_i32_1 = arith.constant 0 : i32
    return %arg0, %c0_i32, %c0_i32_0 : i32, i32, i32
  }
}

</mosaic_0001>

<llo_original>
// kernel: tpu_custom_call.1
$region0: #{tpu_custom_call.1}
  #allocation0 [shape = 'u32[]', space=smem, size = 0x4, offset = 0x4, fixed_abs, tag = 'smem constant byte address 0x4 - core index']
  #allocation1 [shape = 'u32[144,128]{1,0:T(1,128)}', space=vmem, size = 0x12000, scoped, tag = 'internal scratch']
  #allocation2 [shape = 'f32[1,128]{1,0:T(1,128)}', space=vmem, size = 0x200, scoped, tag = 'scratch operand']
  %s0 = inlined_call_operand.vmem [shape: f32[2,512,3], index: 0, kind: input, shape index: {}]
  %s1 = inlined_call_operand.vmem [shape: f32[3,64], index: 1, kind: input, shape index: {}]
  %s2 = inlined_call_operand.vmem [shape: f32[1,64], index: 2, kind: input, shape index: {}]
  %s3 = inlined_call_operand.vmem [shape: bf16[64,128], index: 3, kind: input, shape index: {}]
  %s4 = inlined_call_operand.vmem [shape: f32[1,128], index: 4, kind: input, shape index: {}]
  %s5 = inlined_call_operand.vmem [shape: bf16[128,128], index: 5, kind: input, shape index: {}]
  %s6 = inlined_call_operand.vmem [shape: f32[1,128], index: 6, kind: input, shape index: {}]
  %s7 = inlined_call_operand.vmem [shape: bf16[128,128], index: 7, kind: input, shape index: {}]
  %s8 = inlined_call_operand.vmem [shape: f32[1,128], index: 8, kind: input, shape index: {}]
  %s9 = inlined_call_operand.hbm [shape: f32[2,1,128], index: 9, kind: output, shape index: {}]
  %s10 = sld [smem:[#allocation0]]
  $region77: #{tpu_custom_call.1} parent=0
    _
  %s12 = ssub.s32 1, %s10
  %s13 = scalar_select 0, %s12, %s10
  $region1: #{tpu_custom_call.1} parent=0
    #allocation3 [shape = 'u8[1024]{0}', space=vmem, size = 0x400, scoped, tag = 'output window, operand 0']
    #allocation4 [shape = 's32[2]{0}', space=sflag, size = 0x8, scoped, tag = 'scoped memory for tpu_custom_call.1']
    %14 = vsyncpa [#allocation4], 0
    %s15 = scalar_lea.sflag [#allocation4], 1
    %16 = vsyncpa %s15, 0
    loop: start=0, step=1, limit=10
    $region2: #{tpu_custom_call.1} parent=1 // loop_pre_header
      _
    $region3: #{tpu_custom_call.1} parent=1 // loop_header
      %s18 = sphi 0, %s22
      %p19 = scmp.ge.s32.totalorder %s18, 10
      %s25 = sphi 0, %s37
      %s26 = sphi 0, %s33
      %s27 = sphi 0, %s25
      %s28 = sphi 0, %s26
      %s29 = sphi 0, %s27
      %s30 = sphi 0, %s28
      %s42 = sphi 0, %s44
      %s45 = sphi 0, %s42
      %s46 = sphi 0, %s45
      %s62 = sphi 0, %s46
      %s66 = sphi 0, %s66
      %s68 = sphi 0, %s66
      %s69 = sphi 0, %s68
      %s83 = sphi 0, %s69
      %s87 = sphi 0, %s87
      %s89 = sphi 0, %s87
      %s90 = sphi 0, %s89
      %s104 = sphi 0, %s90
      %s108 = sphi 0, %s108
      %s110 = sphi 0, %s108
      %s111 = sphi 0, %s110
      %s125 = sphi 0, %s111
      %s129 = sphi 0, %s129
      %s131 = sphi 0, %s129
      %s132 = sphi 0, %s131
      %s146 = sphi 0, %s132
      %s150 = sphi 0, %s150
      %s152 = sphi 0, %s150
      %s153 = sphi 0, %s152
      %s167 = sphi 0, %s153
      %s171 = sphi 0, %s171
      %s173 = sphi 0, %s171
      %s174 = sphi 0, %s173
      %s188 = sphi 0, %s174
      %s192 = sphi 0, %s192
      %s194 = sphi 0, %s192
      %s195 = sphi 0, %s194
      %s209 = sphi 0, %s195
      %s213 = sphi 0, %s213
      %s215 = sphi 0, %s213
      %s216 = sphi 0, %s215
      %s230 = sphi 0, %s216
      %s236 = sphi 0, %s238
      %s239 = sphi 0, %s236
      %s240 = sphi 0, %s239
      %s256 = sphi 0, %s240
    $region4: #{tpu_custom_call.1} parent=1 // loop_header_branch
      %21 = sbr.rel (%p19) target = $region8
    $region5: #{tpu_custom_call.1} parent=1 // loop_body
      %s23 = ssub.s32 %s18, 1
      %s24 = ssub.s32 %s18, 2
      %s31 = sadd.s32 1, %s26
      %p32 = scmp.ge.s32.totalorder %s31, 4
      %s33 = scalar_select %p32, 0, %s31
      %s34 = sadd.s32 1, %s25
      %s35 = scalar_select %p32, %s34, %s25
      %p36 = scmp.ge.s32.totalorder %s35, 2
      %s37 = scalar_select %p36, 0, %s35
      %s38 = ssub.s32 %s25, %s37
      %s39 = ssub.s32 %s26, %s33
      %s40 = sor.u32 %s38, %s39
      %p41 = scmp.eq.s32.totalorder %s40, 0
      %s43 = sadd.s32 %s42, 1
      %s44 = scalar_select %p41, %s42, %s43
      %p47 = pneg %p41
      %p48 = scmp.eq.s32.totalorder %s18, 7
      %p49 = por %p47, %p48
      %p50 = scmp.ne.s32.totalorder %s42, %s45
      %p51 = scmp.eq.s32.totalorder %s18, 0
      %p52 = por %p50, %p51
      %p53 = scmp.ne.s32.totalorder %s42, %s45
      %p54 = scmp.eq.s32.totalorder %s23, 7
      %p55 = por %p53, %p54
      %p56 = scmp.ne.s32.totalorder %s45, %s46
      %p57 = scmp.eq.s32.totalorder %s23, 0
      %p58 = por %p56, %p57
      %p59 = scmp.ne.s32.totalorder %s45, %s46
      %p60 = scmp.eq.s32.totalorder %s24, 7
      %p61 = por %p59, %p60
      %p63 = scmp.ne.s32.totalorder %s46, %s62
      %p64 = scmp.eq.s32.totalorder %s24, 0
      %p65 = por %p63, %p64
      %s67 = sadd.s32 %s66, 1
      %p70 = scmp.eq.s32.totalorder %s18, 7
      %p71 = scmp.ne.s32.totalorder %s66, %s68
      %p72 = scmp.eq.s32.totalorder %s18, 0
      %p73 = por %p71, %p72
      %p74 = scmp.ne.s32.totalorder %s66, %s68
      %p75 = scmp.eq.s32.totalorder %s23, 7
      %p76 = por %p74, %p75
      %p77 = scmp.ne.s32.totalorder %s68, %s69
      %p78 = scmp.eq.s32.totalorder %s23, 0
      %p79 = por %p77, %p78
      %p80 = scmp.ne.s32.totalorder %s68, %s69
      %p81 = scmp.eq.s32.totalorder %s24, 7
      %p82 = por %p80, %p81
      %p84 = scmp.ne.s32.totalorder %s69, %s83
      %p85 = scmp.eq.s32.totalorder %s24, 0
      %p86 = por %p84, %p85
      %s88 = sadd.s32 %s87, 1
      %p91 = scmp.eq.s32.totalorder %s18, 7
      %p92 = scmp.ne.s32.totalorder %s87, %s89
      %p93 = scmp.eq.s32.totalorder %s18, 0
      %p94 = por %p92, %p93
      %p95 = scmp.ne.s32.totalorder %s87, %s89
      %p96 = scmp.eq.s32.totalorder %s23, 7
      %p97 = por %p95, %p96
      %p98 = scmp.ne.s32.totalorder %s89, %s90
      %p99 = scmp.eq.s32.totalorder %s23, 0
      %p100 = por %p98, %p99
      %p101 = scmp.ne.s32.totalorder %s89, %s90
      %p102 = scmp.eq.s32.totalorder %s24, 7
      %p103 = por %p101, %p102
      %p105 = scmp.ne.s32.totalorder %s90, %s104
      %p106 = scmp.eq.s32.totalorder %s24, 0
      %p107 = por %p105, %p106
      %s109 = sadd.s32 %s108, 1
      %p112 = scmp.eq.s32.totalorder %s18, 7
      %p113 = scmp.ne.s32.totalorder %s108, %s110
      %p114 = scmp.eq.s32.totalorder %s18, 0
      %p115 = por %p113, %p114
      %p116 = scmp.ne.s32.totalorder %s108, %s110
      %p117 = scmp.eq.s32.totalorder %s23, 7
      %p118 = por %p116, %p117
      %p119 = scmp.ne.s32.totalorder %s110, %s111
      %p120 = scmp.eq.s32.totalorder %s23, 0
      %p121 = por %p119, %p120
      %p122 = scmp.ne.s32.totalorder %s110, %s111
      %p123 = scmp.eq.s32.totalorder %s24, 7
      %p124 = por %p122, %p123
      %p126 = scmp.ne.s32.totalorder %s111, %s125
      %p127 = scmp.eq.s32.totalorder %s24, 0
      %p128 = por %p126, %p127
      %s130 = sadd.s32 %s129, 1
      %p133 = scmp.eq.s32.totalorder %s18, 7
      %p134 = scmp.ne.s32.totalorder %s129, %s131
      %p135 = scmp.eq.s32.totalorder %s18, 0
      %p136 = por %p134, %p135
      %p137 = scmp.ne.s32.totalorder %s129, %s131
      %p138 = scmp.eq.s32.totalorder %s23, 7
      %p139 = por %p137, %p138
      %p140 = scmp.ne.s32.totalorder %s131, %s132
      %p141 = scmp.eq.s32.totalorder %s23, 0
      %p142 = por %p140, %p141
      %p143 = scmp.ne.s32.totalorder %s131, %s132
      %p144 = scmp.eq.s32.totalorder %s24, 7
      %p145 = por %p143, %p144
      %p147 = scmp.ne.s32.totalorder %s132, %s146
      %p148 = scmp.eq.s32.totalorder %s24, 0
      %p149 = por %p147, %p148
      %s151 = sadd.s32 %s150, 1
      %p154 = scmp.eq.s32.totalorder %s18, 7
      %p155 = scmp.ne.s32.totalorder %s150, %s152
      %p156 = scmp.eq.s32.totalorder %s18, 0
      %p157 = por %p155, %p156
      %p158 = scmp.ne.s32.totalorder %s150, %s152
      %p159 = scmp.eq.s32.totalorder %s23, 7
      %p160 = por %p158, %p159
      %p161 = scmp.ne.s32.totalorder %s152, %s153
      %p162 = scmp.eq.s32.totalorder %s23, 0
      %p163 = por %p161, %p162
      %p164 = scmp.ne.s32.totalorder %s152, %s153
      %p165 = scmp.eq.s32.totalorder %s24, 7
      %p166 = por %p164, %p165
      %p168 = scmp.ne.s32.totalorder %s153, %s167
      %p169 = scmp.eq.s32.totalorder %s24, 0
      %p170 = por %p168, %p169
      %s172 = sadd.s32 %s171, 1
      %p175 = scmp.eq.s32.totalorder %s18, 7
      %p176 = scmp.ne.s32.totalorder %s171, %s173
      %p177 = scmp.eq.s32.totalorder %s18, 0
      %p178 = por %p176, %p177
      %p179 = scmp.ne.s32.totalorder %s171, %s173
      %p180 = scmp.eq.s32.totalorder %s23, 7
      %p181 = por %p179, %p180
      %p182 = scmp.ne.s32.totalorder %s173, %s174
      %p183 = scmp.eq.s32.totalorder %s23, 0
      %p184 = por %p182, %p183
      %p185 = scmp.ne.s32.totalorder %s173, %s174
      %p186 = scmp.eq.s32.totalorder %s24, 7
      %p187 = por %p185, %p186
      %p189 = scmp.ne.s32.totalorder %s174, %s188
      %p190 = scmp.eq.s32.totalorder %s24, 0
      %p191 = por %p189, %p190
      %s193 = sadd.s32 %s192, 1
      %p196 = scmp.eq.s32.totalorder %s18, 7
      %p197 = scmp.ne.s32.totalorder %s192, %s194
      %p198 = scmp.eq.s32.totalorder %s18, 0
      %p199 = por %p197, %p198
      %p200 = scmp.ne.s32.totalorder %s192, %s194
      %p201 = scmp.eq.s32.totalorder %s23, 7
      %p202 = por %p200, %p201
      %p203 = scmp.ne.s32.totalorder %s194, %s195
      %p204 = scmp.eq.s32.totalorder %s23, 0
      %p205 = por %p203, %p204
      %p206 = scmp.ne.s32.totalorder %s194, %s195
      %p207 = scmp.eq.s32.totalorder %s24, 7
      %p208 = por %p206, %p207
      %p210 = scmp.ne.s32.totalorder %s195, %s209
      %p211 = scmp.eq.s32.totalorder %s24, 0
      %p212 = por %p210, %p211
      %s214 = sadd.s32 %s213, 1
      %p217 = scmp.eq.s32.totalorder %s18, 7
      %p218 = scmp.ne.s32.totalorder %s213, %s215
      %p219 = scmp.eq.s32.totalorder %s18, 0
      %p220 = por %p218, %p219
      %p221 = scmp.ne.s32.totalorder %s213, %s215
      %p222 = scmp.eq.s32.totalorder %s23, 7
      %p223 = por %p221, %p222
      %p224 = scmp.ne.s32.totalorder %s215, %s216
      %p225 = scmp.eq.s32.totalorder %s23, 0
      %p226 = por %p224, %p225
      %p227 = scmp.ne.s32.totalorder %s215, %s216
      %p228 = scmp.eq.s32.totalorder %s24, 7
      %p229 = por %p227, %p228
      %p231 = scmp.ne.s32.totalorder %s216, %s230
      %p232 = scmp.eq.s32.totalorder %s24, 0
      %p233 = por %p231, %p232
      %s234 = ssub.s32 %s25, %s37
      %p235 = scmp.eq.s32.totalorder %s234, 0
      %s237 = sadd.s32 %s236, 1
      %s238 = scalar_select %p235, %s236, %s237
      %p241 = pneg %p235
      %p242 = scmp.eq.s32.totalorder %s18, 7
      %p243 = por %p241, %p242
      %p244 = scmp.ne.s32.totalorder %s236, %s239
      %p245 = scmp.eq.s32.totalorder %s18, 0
      %p246 = por %p244, %p245
      %p247 = scmp.ne.s32.totalorder %s236, %s239
      %p248 = scmp.eq.s32.totalorder %s23, 7
      %p249 = por %p247, %p248
      %p250 = scmp.ne.s32.totalorder %s239, %s240
      %p251 = scmp.eq.s32.totalorder %s23, 0
      %p252 = por %p250, %p251
      %p253 = scmp.ne.s32.totalorder %s239, %s240
      %p254 = scmp.eq.s32.totalorder %s24, 7
      %p255 = por %p253, %p254
      %p257 = scmp.ne.s32.totalorder %s240, %s256
      %p258 = scmp.eq.s32.totalorder %s24, 0
      %p259 = por %p257, %p258
      %p260 = scmp.le.s32.totalorder 1, %s18
      %p261 = scmp.lt.s32.totalorder %s18, 9
      %p262 = pnand %p260, %p261
      %p263 = pneg %p262
      // Predicated region
      $region9: #{tpu_custom_call.1} parent=5 // pred_check
        _
      $region10: #{tpu_custom_call.1} parent=5 // pred_check_branch
        %265 = sbr.rel (%p262) target = $region12
      $region11: #{tpu_custom_call.1} parent=5 // pred_region
        %s266 = ssub.s32 %s18, 1
        // Predicated region
        $region13: #{tpu_custom_call.1} parent=11 // pred_check
          %p267 = pneg %p79
        $region14: #{tpu_custom_call.1} parent=11 // pred_check_branch
          %269 = sbr.rel (%p267) target = $region16
        $region15: #{tpu_custom_call.1} parent=11 // pred_region
          _
        $region16: #{tpu_custom_call.1} parent=11 // pred_fallthru
          _
        // Predicated region
        $region17: #{tpu_custom_call.1} parent=11 // pred_check
          %p270 = pneg %p100
        $region18: #{tpu_custom_call.1} parent=11 // pred_check_branch
          %272 = sbr.rel (%p270) target = $region20
        $region19: #{tpu_custom_call.1} parent=11 // pred_region
          _
        $region20: #{tpu_custom_call.1} parent=11 // pred_fallthru
          _
        // Predicated region
        $region21: #{tpu_custom_call.1} parent=11 // pred_check
          %p273 = pneg %p121
        $region22: #{tpu_custom_call.1} parent=11 // pred_check_branch
          %275 = sbr.rel (%p273) target = $region24
        $region23: #{tpu_custom_call.1} parent=11 // pred_region
          _
        $region24: #{tpu_custom_call.1} parent=11 // pred_fallthru
          _
        // Predicated region
        $region25: #{tpu_custom_call.1} parent=11 // pred_check
          %p276 = pneg %p142
        $region26: #{tpu_custom_call.1} parent=11 // pred_check_branch
          %278 = sbr.rel (%p276) target = $region28
        $region27: #{tpu_custom_call.1} parent=11 // pred_region
          _
        $region28: #{tpu_custom_call.1} parent=11 // pred_fallthru
          _
        // Predicated region
        $region29: #{tpu_custom_call.1} parent=11 // pred_check
          %p279 = pneg %p163
        $region30: #{tpu_custom_call.1} parent=11 // pred_check_branch
          %281 = sbr.rel (%p279) target = $region32
        $region31: #{tpu_custom_call.1} parent=11 // pred_region
          _
        $region32: #{tpu_custom_call.1} parent=11 // pred_fallthru
          _
        // Predicated region
        $region33: #{tpu_custom_call.1} parent=11 // pred_check
          %p282 = pneg %p184
        $region34: #{tpu_custom_call.1} parent=11 // pred_check_branch
          %284 = sbr.rel (%p282) target = $region36
        $region35: #{tpu_custom_call.1} parent=11 // pred_region
          _
        $region36: #{tpu_custom_call.1} parent=11 // pred_fallthru
          _
        // Predicated region
        $region37: #{tpu_custom_call.1} parent=11 // pred_check
          %p285 = pneg %p205
        $region38: #{tpu_custom_call.1} parent=11 // pred_check_branch
          %287 = sbr.rel (%p285) target = $region40
        $region39: #{tpu_custom_call.1} parent=11 // pred_region
          _
        $region40: #{tpu_custom_call.1} parent=11 // pred_fallthru
          _
        // Predicated region
        $region41: #{tpu_custom_call.1} parent=11 // pred_check
          %p288 = pneg %p226
        $region42: #{tpu_custom_call.1} parent=11 // pred_check_branch
          %290 = sbr.rel (%p288) target = $region44
        $region43: #{tpu_custom_call.1} parent=11 // pred_region
          _
        $region44: #{tpu_custom_call.1} parent=11 // pred_fallthru
          _
      $region12: #{tpu_custom_call.1} parent=5 // pred_fallthru
        _
      %p291 = scmp.lt.s32.totalorder %s18, 8
      // Predicated region
      $region45: #{tpu_custom_call.1} parent=5 // pred_check
        %p292 = pneg %p291
      $region46: #{tpu_custom_call.1} parent=5 // pred_check_branch
        %294 = sbr.rel (%p292) target = $region48
      $region47: #{tpu_custom_call.1} parent=5 // pred_region
        // Predicated region
        $region49: #{tpu_custom_call.1} parent=47 // pred_check
          %p295 = pneg %p52
        $region50: #{tpu_custom_call.1} parent=47 // pred_check_branch
          %297 = sbr.rel (%p295) target = $region52
        $region51: #{tpu_custom_call.1} parent=47 // pred_region
          %s298 = smul.u32 16, %s26
          %p299 = scmp.lt.s32.totalorder %s25, 1
          %s300 = scalar_select %p299, %s25, 1
          %p301 = scmp.lt.s32.totalorder %s298, 63
          %s302 = scalar_select %p301, %s298, 63
          %s303 = smul.addr %s300, 64
          %s304 = sadd.s32 %s302, %s303
          %s305 = smul.addr %s304, 8
          %s306 = scalar_lea.vmem %s0, %s305
          %s307 = smul.u32 16, %s26
        $region52: #{tpu_custom_call.1} parent=47 // pred_fallthru
          _
      $region48: #{tpu_custom_call.1} parent=5 // pred_fallthru
        _
      %p308 = scmp.le.s32.totalorder 1, %s18
      %p309 = scmp.lt.s32.totalorder %s18, 9
      %p310 = pnand %p308, %p309
      %p311 = pneg %p310
      // Predicated region
      $region53: #{tpu_custom_call.1} parent=5 // pred_check
        _
      $region54: #{tpu_custom_call.1} parent=5 // pred_check_branch
        %313 = sbr.rel (%p310) target = $region56
      $region55: #{tpu_custom_call.1} parent=5 // pred_region
        %s314 = ssub.s32 %s18, 1
        %s315 = smul.u32 16, %s28
        %p316 = scmp.lt.s32.totalorder %s27, 1
        %s317 = scalar_select %p316, %s27, 1
        %p318 = scmp.lt.s32.totalorder %s315, 63
        %s319 = scalar_select %p318, %s315, 63
        %s320 = smul.addr %s317, 64
        %s321 = sadd.s32 %s319, %s320
        %s322 = smul.addr %s321, 8
        %s323 = scalar_lea.vmem %s0, %s322
        %p324 = pneg %p58
        %p325 = pneg %p55
        %p326 = pneg %p79
        %p327 = pneg %p76
        %p328 = pneg %p100
        %p329 = pneg %p97
        %p330 = pneg %p121
        %p331 = pneg %p118
        %p332 = pneg %p142
        %p333 = pneg %p139
        %p334 = pneg %p163
        %p335 = pneg %p160
        %p336 = pneg %p184
        %p337 = pneg %p181
        %p338 = pneg %p205
        %p339 = pneg %p202
        %p340 = pneg %p226
        %p341 = pneg %p223
        %p342 = pneg %p252
        %p343 = pneg %p249
        %s344 = sand.u32 %s239, 1
        %s345 = scalar_lea.sflag [#allocation4], %s344
        %s346 = sand.u32 %s239, 1
        %s347 = scalar_lea.vmem [#allocation3], %s346
        %s348 = smul.u32 16, %s28
        %p349 = scmp.lt.s32.totalorder %s27, 1
        %s350 = scalar_select %p349, %s27, 1
        %p351 = scmp.lt.s32.totalorder %s348, 63
        %s352 = scalar_select %p351, %s348, 63
        %s353 = smul.addr %s350, 64
        %s354 = sadd.s32 %s352, %s353
        %s355 = smul.addr %s354, 8
        %s356 = scalar_lea.vmem %s0, %s355
        %s357 = smul.u32 16, %s28
        %p359 = scmp.eq.s32.totalorder %s28, 0
        // Predicated region
        $region57: #{tpu_custom_call.1} parent=55 // pred_check
          %p360 = pneg %p359
        $region58: #{tpu_custom_call.1} parent=55 // pred_check_branch
          %362 = sbr.rel (%p360) target = $region60
        $region59: #{tpu_custom_call.1} parent=55 // pred_region
          %363 = vst [vmem:[#allocation2] sm:$0x1] -inf
        $region60: #{tpu_custom_call.1} parent=55 // pred_fallthru
          _
        %v364 = vld [vmem:[%s1] sm:$0x7]
        %v365 = vld [vmem:[%s356] sm:$0xff]
        %v366 = vld [vmem:[%s356 + $0x8] sm:$0xff]
        %v367 = vld [vmem:[%s356 + $0x10] sm:$0xff]
        %v368 = vld [vmem:[%s356 + $0x18] sm:$0xff]
        %v369 = vld [vmem:[%s356 + $0x20] sm:$0xff]
        %v370 = vld [vmem:[%s356 + $0x28] sm:$0xff]
        %v371 = vld [vmem:[%s356 + $0x30] sm:$0xff]
        %v372 = vld [vmem:[%s356 + $0x38] sm:$0xff]
        %v373 = vld [vmem:[%s356 + $0x40] sm:$0xff]
        %v374 = vld [vmem:[%s356 + $0x48] sm:$0xff]
        %v375 = vld [vmem:[%s356 + $0x50] sm:$0xff]
        %v376 = vld [vmem:[%s356 + $0x58] sm:$0xff]
        %v377 = vld [vmem:[%s356 + $0x60] sm:$0xff]
        %v378 = vld [vmem:[%s356 + $0x68] sm:$0xff]
        %v379 = vld [vmem:[%s356 + $0x70] sm:$0xff]
        %v380 = vld [vmem:[%s356 + $0x78] sm:$0xff]
        %382 = vset.pattern.permute.xlu0 0
        %383 = vperm.xlu0 %382, %v365
        %v384 = vpop.permute.xlu0 %383
        %387 = vset.pattern.permute.xlu0 0
        %388 = vperm.xlu0 %387, %v366
        %v389 = vpop.permute.xlu0 %388
        %392 = vset.pattern.permute.xlu0 0
        %393 = vperm.xlu0 %392, %v367
        %v394 = vpop.permute.xlu0 %393
        %397 = vset.pattern.permute.xlu0 0
        %398 = vperm.xlu0 %397, %v368
        %v399 = vpop.permute.xlu0 %398
        %402 = vset.pattern.permute.xlu0 0
        %403 = vperm.xlu0 %402, %v369
        %v404 = vpop.permute.xlu0 %403
        %407 = vset.pattern.permute.xlu0 0
        %408 = vperm.xlu0 %407, %v370
        %v409 = vpop.permute.xlu0 %408
        %412 = vset.pattern.permute.xlu0 0
        %413 = vperm.xlu0 %412, %v371
        %v414 = vpop.permute.xlu0 %413
        %417 = vset.pattern.permute.xlu0 0
        %418 = vperm.xlu0 %417, %v372
        %v419 = vpop.permute.xlu0 %418
        %422 = vset.pattern.permute.xlu0 0
        %423 = vperm.xlu0 %422, %v373
        %v424 = vpop.permute.xlu0 %423
        %427 = vset.pattern.permute.xlu0 0
        %428 = vperm.xlu0 %427, %v374
        %v429 = vpop.permute.xlu0 %428
        %432 = vset.pattern.permute.xlu0 0
        %433 = vperm.xlu0 %432, %v375
        %v434 = vpop.permute.xlu0 %433
        %437 = vset.pattern.permute.xlu0 0
        %438 = vperm.xlu0 %437, %v376
        %v439 = vpop.permute.xlu0 %438
        %442 = vset.pattern.permute.xlu0 0
        %443 = vperm.xlu0 %442, %v377
        %v444 = vpop.permute.xlu0 %443
        %447 = vset.pattern.permute.xlu0 0
        %448 = vperm.xlu0 %447, %v378
        %v449 = vpop.permute.xlu0 %448
        %452 = vset.pattern.permute.xlu0 0
        %453 = vperm.xlu0 %452, %v379
        %v454 = vpop.permute.xlu0 %453
        %457 = vset.pattern.permute.xlu0 0
        %458 = vperm.xlu0 %457, %v380
        %v459 = vpop.permute.xlu0 %458
        %v461 = vlaneseq
        %v462 = vshrl.u32 %v461, 7
        %v463 = vsub.s32 0, %v462
        %v464 = vrot.slane %v364, %v463
        %v465 = vmul.f32 %v384, %v464
        %v466 = vmul.f32 %v389, %v464
        %v467 = vmul.f32 %v394, %v464
        %v468 = vmul.f32 %v399, %v464
        %v469 = vmul.f32 %v404, %v464
        %v470 = vmul.f32 %v409, %v464
        %v471 = vmul.f32 %v414, %v464
        %v472 = vmul.f32 %v419, %v464
        %v473 = vmul.f32 %v424, %v464
        %v474 = vmul.f32 %v429, %v464
        %v475 = vmul.f32 %v434, %v464
        %v476 = vmul.f32 %v439, %v464
        %v477 = vmul.f32 %v444, %v464
        %v478 = vmul.f32 %v449, %v464
        %v479 = vmul.f32 %v454, %v464
        %v480 = vmul.f32 %v459, %v464
        %481 = vset.pattern.permute.xlu0 1
        %482 = vperm.xlu0 %481, %v365
        %v483 = vpop.permute.xlu0 %482
        %485 = vset.pattern.permute.xlu0 1
        %486 = vperm.xlu0 %485, %v366
        %v487 = vpop.permute.xlu0 %486
        %489 = vset.pattern.permute.xlu0 1
        %490 = vperm.xlu0 %489, %v367
        %v491 = vpop.permute.xlu0 %490
        %493 = vset.pattern.permute.xlu0 1
        %494 = vperm.xlu0 %493, %v368
        %v495 = vpop.permute.xlu0 %494
        %497 = vset.pattern.permute.xlu0 1
        %498 = vperm.xlu0 %497, %v369
        %v499 = vpop.permute.xlu0 %498
        %501 = vset.pattern.permute.xlu0 1
        %502 = vperm.xlu0 %501, %v370
        %v503 = vpop.permute.xlu0 %502
        %505 = vset.pattern.permute.xlu0 1
        %506 = vperm.xlu0 %505, %v371
        %v507 = vpop.permute.xlu0 %506
        %509 = vset.pattern.permute.xlu0 1
        %510 = vperm.xlu0 %509, %v372
        %v511 = vpop.permute.xlu0 %510
        %513 = vset.pattern.permute.xlu0 1
        %514 = vperm.xlu0 %513, %v373
        %v515 = vpop.permute.xlu0 %514
        %517 = vset.pattern.permute.xlu0 1
        %518 = vperm.xlu0 %517, %v374
        %v519 = vpop.permute.xlu0 %518
        %521 = vset.pattern.permute.xlu0 1
        %522 = vperm.xlu0 %521, %v375
        %v523 = vpop.permute.xlu0 %522
        %525 = vset.pattern.permute.xlu0 1
        %526 = vperm.xlu0 %525, %v376
        %v527 = vpop.permute.xlu0 %526
        %529 = vset.pattern.permute.xlu0 1
        %530 = vperm.xlu0 %529, %v377
        %v531 = vpop.permute.xlu0 %530
        %533 = vset.pattern.permute.xlu0 1
        %534 = vperm.xlu0 %533, %v378
        %v535 = vpop.permute.xlu0 %534
        %537 = vset.pattern.permute.xlu0 1
        %538 = vperm.xlu0 %537, %v379
        %v539 = vpop.permute.xlu0 %538
        %541 = vset.pattern.permute.xlu0 1
        %542 = vperm.xlu0 %541, %v380
        %v543 = vpop.permute.xlu0 %542
        %v545 = vlaneseq
        %v546 = vshrl.u32 %v545, 7
        %v547 = vsub.s32 1, %v546
        %v548 = vrot.slane %v364, %v547
        %v549 = vmul.f32 %v483, %v548
        %v550 = vmul.f32 %v487, %v548
        %v551 = vmul.f32 %v491, %v548
        %v552 = vmul.f32 %v495, %v548
        %v553 = vmul.f32 %v499, %v548
        %v554 = vmul.f32 %v503, %v548
        %v555 = vmul.f32 %v507, %v548
        %v556 = vmul.f32 %v511, %v548
        %v557 = vmul.f32 %v515, %v548
        %v558 = vmul.f32 %v519, %v548
        %v559 = vmul.f32 %v523, %v548
        %v560 = vmul.f32 %v527, %v548
        %v561 = vmul.f32 %v531, %v548
        %v562 = vmul.f32 %v535, %v548
        %v563 = vmul.f32 %v539, %v548
        %v564 = vmul.f32 %v543, %v548
        %v565 = vadd.f32 %v465, %v549
        %v566 = vadd.f32 %v466, %v550
        %v567 = vadd.f32 %v467, %v551
        %v568 = vadd.f32 %v468, %v552
        %v569 = vadd.f32 %v469, %v553
        %v570 = vadd.f32 %v470, %v554
        %v571 = vadd.f32 %v471, %v555
        %v572 = vadd.f32 %v472, %v556
        %v573 = vadd.f32 %v473, %v557
        %v574 = vadd.f32 %v474, %v558
        %v575 = vadd.f32 %v475, %v559
        %v576 = vadd.f32 %v476, %v560
        %v577 = vadd.f32 %v477, %v561
        %v578 = vadd.f32 %v478, %v562
        %v579 = vadd.f32 %v479, %v563
        %v580 = vadd.f32 %v480, %v564
        %581 = vset.pattern.permute.xlu0 2
        %582 = vperm.xlu0 %581, %v365
        %v583 = vpop.permute.xlu0 %582
        %585 = vset.pattern.permute.xlu0 2
        %586 = vperm.xlu0 %585, %v366
        %v587 = vpop.permute.xlu0 %586
        %589 = vset.pattern.permute.xlu0 2
        %590 = vperm.xlu0 %589, %v367
        %v591 = vpop.permute.xlu0 %590
        %593 = vset.pattern.permute.xlu0 2
        %594 = vperm.xlu0 %593, %v368
        %v595 = vpop.permute.xlu0 %594
        %597 = vset.pattern.permute.xlu0 2
        %598 = vperm.xlu0 %597, %v369
        %v599 = vpop.permute.xlu0 %598
        %601 = vset.pattern.permute.xlu0 2
        %602 = vperm.xlu0 %601, %v370
        %v603 = vpop.permute.xlu0 %602
        %605 = vset.pattern.permute.xlu0 2
        %606 = vperm.xlu0 %605, %v371
        %v607 = vpop.permute.xlu0 %606
        %609 = vset.pattern.permute.xlu0 2
        %610 = vperm.xlu0 %609, %v372
        %v611 = vpop.permute.xlu0 %610
        %613 = vset.pattern.permute.xlu0 2
        %614 = vperm.xlu0 %613, %v373
        %v615 = vpop.permute.xlu0 %614
        %617 = vset.pattern.permute.xlu0 2
        %618 = vperm.xlu0 %617, %v374
        %v619 = vpop.permute.xlu0 %618
        %621 = vset.pattern.permute.xlu0 2
        %622 = vperm.xlu0 %621, %v375
        %v623 = vpop.permute.xlu0 %622
        %625 = vset.pattern.permute.xlu0 2
        %626 = vperm.xlu0 %625, %v376
        %v627 = vpop.permute.xlu0 %626
        %629 = vset.pattern.permute.xlu0 2
        %630 = vperm.xlu0 %629, %v377
        %v631 = vpop.permute.xlu0 %630
        %633 = vset.pattern.permute.xlu0 2
        %634 = vperm.xlu0 %633, %v378
        %v635 = vpop.permute.xlu0 %634
        %637 = vset.pattern.permute.xlu0 2
        %638 = vperm.xlu0 %637, %v379
        %v639 = vpop.permute.xlu0 %638
        %641 = vset.pattern.permute.xlu0 2
        %642 = vperm.xlu0 %641, %v380
        %v643 = vpop.permute.xlu0 %642
        %v645 = vlaneseq
        %v646 = vshrl.u32 %v645, 7
        %v647 = vsub.s32 2, %v646
        %v648 = vrot.slane %v364, %v647
        %v649 = vmul.f32 %v583, %v648
        %v650 = vmul.f32 %v587, %v648
        %v651 = vmul.f32 %v591, %v648
        %v652 = vmul.f32 %v595, %v648
        %v653 = vmul.f32 %v599, %v648
        %v654 = vmul.f32 %v603, %v648
        %v655 = vmul.f32 %v607, %v648
        %v656 = vmul.f32 %v611, %v648
        %v657 = vmul.f32 %v615, %v648
        %v658 = vmul.f32 %v619, %v648
        %v659 = vmul.f32 %v623, %v648
        %v660 = vmul.f32 %v627, %v648
        %v661 = vmul.f32 %v631, %v648
        %v662 = vmul.f32 %v635, %v648
        %v663 = vmul.f32 %v639, %v648
        %v664 = vmul.f32 %v643, %v648
        %v665 = vadd.f32 %v565, %v649
        %v666 = vadd.f32 %v566, %v650
        %v667 = vadd.f32 %v567, %v651
        %v668 = vadd.f32 %v568, %v652
        %v669 = vadd.f32 %v569, %v653
        %v670 = vadd.f32 %v570, %v654
        %v671 = vadd.f32 %v571, %v655
        %v672 = vadd.f32 %v572, %v656
        %v673 = vadd.f32 %v573, %v657
        %v674 = vadd.f32 %v574, %v658
        %v675 = vadd.f32 %v575, %v659
        %v676 = vadd.f32 %v576, %v660
        %v677 = vadd.f32 %v577, %v661
        %v678 = vadd.f32 %v578, %v662
        %v679 = vadd.f32 %v579, %v663
        %v680 = vadd.f32 %v580, %v664
        %v681 = vld [vmem:[%s2] sm:$0x1]
        %v683 = vlaneseq
        %v684 = vshrl.u32 %v683, 7
        %v685 = vsub.s32 0, %v684
        %v686 = vrot.slane %v681, %v685
        %v688 = vadd.f32 %v665, %v686
        %v689 = vadd.f32 %v666, %v686
        %v690 = vadd.f32 %v667, %v686
        %v691 = vadd.f32 %v668, %v686
        %v692 = vadd.f32 %v669, %v686
        %v693 = vadd.f32 %v670, %v686
        %v694 = vadd.f32 %v671, %v686
        %v695 = vadd.f32 %v672, %v686
        %v696 = vadd.f32 %v673, %v686
        %v697 = vadd.f32 %v674, %v686
        %v698 = vadd.f32 %v675, %v686
        %v699 = vadd.f32 %v676, %v686
        %v700 = vadd.f32 %v677, %v686
        %v701 = vadd.f32 %v678, %v686
        %v702 = vadd.f32 %v679, %v686
        %v703 = vadd.f32 %v680, %v686
        %v704 = vmax.f32 %v688, 0.0
        %v705 = vmax.f32 %v689, 0.0
        %v706 = vmax.f32 %v690, 0.0
        %v707 = vmax.f32 %v691, 0.0
        %v708 = vmax.f32 %v692, 0.0
        %v709 = vmax.f32 %v693, 0.0
        %v710 = vmax.f32 %v694, 0.0
        %v711 = vmax.f32 %v695, 0.0
        %v712 = vmax.f32 %v696, 0.0
        %v713 = vmax.f32 %v697, 0.0
        %v714 = vmax.f32 %v698, 0.0
        %v715 = vmax.f32 %v699, 0.0
        %v716 = vmax.f32 %v700, 0.0
        %v717 = vmax.f32 %v701, 0.0
        %v718 = vmax.f32 %v702, 0.0
        %v719 = vmax.f32 %v703, 0.0
        %v720 = vpack.c.bf16 %v705, %v704
        %v721 = vpack.c.bf16 %v707, %v706
        %v722 = vpack.c.bf16 %v709, %v708
        %v723 = vpack.c.bf16 %v711, %v710
        %v724 = vpack.c.bf16 %v713, %v712
        %v725 = vpack.c.bf16 %v715, %v714
        %v726 = vpack.c.bf16 %v717, %v716
        %v727 = vpack.c.bf16 %v719, %v718
        %v728 = vld [vmem:[%s3] sm:$0xf]
        %v729 = vld [vmem:[%s3 + $0x4] sm:$0xf]
        %v730 = vld [vmem:[%s3 + $0x8] sm:$0xf]
        %v731 = vld [vmem:[%s3 + $0xc] sm:$0xf]
        %v732 = vld [vmem:[%s3 + $0x10] sm:$0xf]
        %v733 = vld [vmem:[%s3 + $0x14] sm:$0xf]
        %v734 = vld [vmem:[%s3 + $0x18] sm:$0xf]
        %v735 = vld [vmem:[%s3 + $0x1c] sm:$0xf]
        %v736 = vld [vmem:[%s4] sm:$0x1]
        %v738 = vlaneseq
        %v739 = vshrl.u32 %v738, 7
        %v740 = vsub.s32 0, %v739
        %v741 = vrot.slane %v736, %v740
        %v751 = vunpack.c.l.b16 %v728
        %v752 = vunpack.c.l.b16 %v729
        %v753 = vunpack.c.l.b16 %v730
        %v754 = vunpack.c.l.b16 %v731
        %v755 = vunpack.c.l.b16 %v732
        %v756 = vunpack.c.l.b16 %v733
        %v757 = vunpack.c.l.b16 %v734
        %v758 = vunpack.c.l.b16 %v735
        %v759 = vpack.c.b16 %v752, %v751
        %v760 = vpack.c.b16 %v754, %v753
        %v761 = vpack.c.b16 %v756, %v755
        %v762 = vpack.c.b16 %v758, %v757
        %vm767 = vcmask 523264
        %v769 = vsel %vm767, %v720, 0
        %v772 = vsel %vm767, %v721, 0
        %v775 = vsel %vm767, %v722, 0
        %v778 = vsel %vm767, %v723, 0
        %v781 = vsel %vm767, %v724, 0
        %v784 = vsel %vm767, %v725, 0
        %v787 = vsel %vm767, %v726, 0
        %v790 = vsel %vm767, %v727, 0
        %792 = vmatprep.subr.bf16.mxu0 0
        %793 = vmatpush1.bf16.msra.mxu0 0
        %794 = vmatprep.subr.bf16.mxu0 0
        %795 = vmatpush1.bf16.msra.mxu0 0
        %796 = vmatprep.subr.bf16.mxu0 0
        %797 = vmatpush1.bf16.msra.mxu0 0
        %798 = vmatprep.subr.bf16.mxu0 0
        %799 = vmatpush1.bf16.msra.mxu0 0
        %800 = vmatprep.subr.bf16.mxu0 0
        %801 = vmatpush1.bf16.msra.mxu0 %v762
        %802 = vmatprep.subr.bf16.mxu0 0
        %803 = vmatpush1.bf16.msra.mxu0 %v761
        %804 = vmatprep.subr.bf16.mxu0 0
        %805 = vmatpush1.bf16.msra.mxu0 %v760
        %806 = vmatprep.subr.bf16.mxu0 0
        %807 = vmatpush1.bf16.msra.mxu0 %v759
        %808 = vmatprep.subr.bf16.mxu0 0
        %809 = vmatpush2.bf16.msra.mxu0 0
        %810 = vmatprep.subr.bf16.mxu0 0
        %811 = vmatpush2.bf16.msra.mxu0 0
        %812 = vmatprep.subr.bf16.mxu0 0
        %813 = vmatpush2.bf16.msra.mxu0 0
        %814 = vmatprep.subr.bf16.mxu0 0
        %815 = vmatpush2.bf16.msra.mxu0 0
        %816 = vmatprep.subr.bf16.mxu0 0
        %817 = vmatpush2.bf16.msra.mxu0 0
        %818 = vmatprep.subr.bf16.mxu0 0
        %819 = vmatpush2.bf16.msra.mxu0 0
        %820 = vmatprep.subr.bf16.mxu0 0
        %821 = vmatpush2.bf16.msra.mxu0 0
        %822 = vmatprep.subr.bf16.mxu0 0
        %823 = vmatpush2.bf16.msra.mxu0 0
        %824 = vmatprep.mubr.bf16.mxu0 0
        %825 = vmatmul.mubr.bf16.gmra.mxu0 %v769
        %v826 = vpop.f32.mrf.mxu0
        %v827 = vadd.f32 %v741, %v826
        %v828 = vpop.f32.mrf.mxu0
        %v829 = vpop.f32.mrf.mxu0
        %v830 = vadd.f32 %v741, %v829
        %v831 = vpop.f32.mrf.mxu0
        %832 = vmatprep.mubr.bf16.mxu0 0
        %833 = vmatmul.mubr.bf16.gmra.mxu0 %v772
        %v834 = vpop.f32.mrf.mxu0
        %v835 = vadd.f32 %v741, %v834
        %v836 = vpop.f32.mrf.mxu0
        %v837 = vpop.f32.mrf.mxu0
        %v838 = vadd.f32 %v741, %v837
        %v839 = vpop.f32.mrf.mxu0
        %840 = vmatprep.mubr.bf16.mxu0 0
        %841 = vmatmul.mubr.bf16.gmra.mxu0 %v775
        %v842 = vpop.f32.mrf.mxu0
        %v843 = vadd.f32 %v741, %v842
        %v844 = vpop.f32.mrf.mxu0
        %v845 = vpop.f32.mrf.mxu0
        %v846 = vadd.f32 %v741, %v845
        %v847 = vpop.f32.mrf.mxu0
        %848 = vmatprep.mubr.bf16.mxu0 0
        %849 = vmatmul.mubr.bf16.gmra.mxu0 %v778
        %v850 = vpop.f32.mrf.mxu0
        %v851 = vadd.f32 %v741, %v850
        %v852 = vpop.f32.mrf.mxu0
        %v853 = vpop.f32.mrf.mxu0
        %v854 = vadd.f32 %v741, %v853
        %v855 = vpop.f32.mrf.mxu0
        %856 = vmatprep.mubr.bf16.mxu0 0
        %857 = vmatmul.mubr.bf16.gmra.mxu0 %v781
        %v858 = vpop.f32.mrf.mxu0
        %v859 = vadd.f32 %v741, %v858
        %v860 = vpop.f32.mrf.mxu0
        %v861 = vpop.f32.mrf.mxu0
        %v862 = vadd.f32 %v741, %v861
        %v863 = vpop.f32.mrf.mxu0
        %864 = vmatprep.mubr.bf16.mxu0 0
        %865 = vmatmul.mubr.bf16.gmra.mxu0 %v784
        %v866 = vpop.f32.mrf.mxu0
        %v867 = vadd.f32 %v741, %v866
        %v868 = vpop.f32.mrf.mxu0
        %v869 = vpop.f32.mrf.mxu0
        %v870 = vadd.f32 %v741, %v869
        %v871 = vpop.f32.mrf.mxu0
        %872 = vmatprep.mubr.bf16.mxu0 0
        %873 = vmatmul.mubr.bf16.gmra.mxu0 %v787
        %v874 = vpop.f32.mrf.mxu0
        %v875 = vadd.f32 %v741, %v874
        %v876 = vpop.f32.mrf.mxu0
        %v877 = vpop.f32.mrf.mxu0
        %v878 = vadd.f32 %v741, %v877
        %v879 = vpop.f32.mrf.mxu0
        %880 = vmatprep.mubr.bf16.mxu0 0
        %881 = vmatmul.mubr.bf16.gmra.mxu0 %v790
        %v882 = vpop.f32.mrf.mxu0
        %v883 = vadd.f32 %v741, %v882
        %v884 = vpop.f32.mrf.mxu0
        %v885 = vpop.f32.mrf.mxu0
        %v886 = vadd.f32 %v741, %v885
        %v887 = vpop.f32.mrf.mxu0
        %888 = vdwg.mxu0
        %v889 = vmax.f32 %v827, 0.0
        %v890 = vmax.f32 %v830, 0.0
        %v891 = vmax.f32 %v835, 0.0
        %v892 = vmax.f32 %v838, 0.0
        %v893 = vmax.f32 %v843, 0.0
        %v894 = vmax.f32 %v846, 0.0
        %v895 = vmax.f32 %v851, 0.0
        %v896 = vmax.f32 %v854, 0.0
        %v897 = vmax.f32 %v859, 0.0
        %v898 = vmax.f32 %v862, 0.0
        %v899 = vmax.f32 %v867, 0.0
        %v900 = vmax.f32 %v870, 0.0
        %v901 = vmax.f32 %v875, 0.0
        %v902 = vmax.f32 %v878, 0.0
        %v903 = vmax.f32 %v883, 0.0
        %v904 = vmax.f32 %v886, 0.0
        %v905 = vpack.c.bf16 %v890, %v889
        %v906 = vpack.c.bf16 %v892, %v891
        %v907 = vpack.c.bf16 %v894, %v893
        %v908 = vpack.c.bf16 %v896, %v895
        %v909 = vpack.c.bf16 %v898, %v897
        %v910 = vpack.c.bf16 %v900, %v899
        %v911 = vpack.c.bf16 %v902, %v901
        %v912 = vpack.c.bf16 %v904, %v903
        %v913 = vld [vmem:[%s5] sm:$0xf]
        %v914 = vld [vmem:[%s5 + $0x4] sm:$0xf]
        %v915 = vld [vmem:[%s5 + $0x8] sm:$0xf]
        %v916 = vld [vmem:[%s5 + $0xc] sm:$0xf]
        %v917 = vld [vmem:[%s5 + $0x10] sm:$0xf]
        %v918 = vld [vmem:[%s5 + $0x14] sm:$0xf]
        %v919 = vld [vmem:[%s5 + $0x18] sm:$0xf]
        %v920 = vld [vmem:[%s5 + $0x1c] sm:$0xf]
        %v921 = vld [vmem:[%s5 + $0x20] sm:$0xf]
        %v922 = vld [vmem:[%s5 + $0x24] sm:$0xf]
        %v923 = vld [vmem:[%s5 + $0x28] sm:$0xf]
        %v924 = vld [vmem:[%s5 + $0x2c] sm:$0xf]
        %v925 = vld [vmem:[%s5 + $0x30] sm:$0xf]
        %v926 = vld [vmem:[%s5 + $0x34] sm:$0xf]
        %v927 = vld [vmem:[%s5 + $0x38] sm:$0xf]
        %v928 = vld [vmem:[%s5 + $0x3c] sm:$0xf]
        %v929 = vld [vmem:[%s6] sm:$0x1]
        %v931 = vlaneseq
        %v932 = vshrl.u32 %v931, 7
        %v933 = vsub.s32 0, %v932
        %v934 = vrot.slane %v929, %v933
        %v952 = vunpack.c.l.b16 %v913
        %v953 = vunpack.c.l.b16 %v914
        %v954 = vunpack.c.l.b16 %v915
        %v955 = vunpack.c.l.b16 %v916
        %v956 = vunpack.c.l.b16 %v917
        %v957 = vunpack.c.l.b16 %v918
        %v958 = vunpack.c.l.b16 %v919
        %v959 = vunpack.c.l.b16 %v920
        %v960 = vunpack.c.l.b16 %v921
        %v961 = vunpack.c.l.b16 %v922
        %v962 = vunpack.c.l.b16 %v923
        %v963 = vunpack.c.l.b16 %v924
        %v964 = vunpack.c.l.b16 %v925
        %v965 = vunpack.c.l.b16 %v926
        %v966 = vunpack.c.l.b16 %v927
        %v967 = vunpack.c.l.b16 %v928
        %v968 = vpack.c.b16 %v953, %v952
        %v969 = vpack.c.b16 %v955, %v954
        %v970 = vpack.c.b16 %v957, %v956
        %v971 = vpack.c.b16 %v959, %v958
        %v972 = vpack.c.b16 %v961, %v960
        %v973 = vpack.c.b16 %v963, %v962
        %v974 = vpack.c.b16 %v965, %v964
        %v975 = vpack.c.b16 %v967, %v966
        %984 = vmatprep.subr.bf16.mxu0 0
        %985 = vmatpush1.bf16.msra.mxu0 %v975
        %986 = vmatprep.subr.bf16.mxu0 0
        %987 = vmatpush1.bf16.msra.mxu0 %v974
        %988 = vmatprep.subr.bf16.mxu0 0
        %989 = vmatpush1.bf16.msra.mxu0 %v973
        %990 = vmatprep.subr.bf16.mxu0 0
        %991 = vmatpush1.bf16.msra.mxu0 %v972
        %992 = vmatprep.subr.bf16.mxu0 0
        %993 = vmatpush1.bf16.msra.mxu0 %v971
        %994 = vmatprep.subr.bf16.mxu0 0
        %995 = vmatpush1.bf16.msra.mxu0 %v970
        %996 = vmatprep.subr.bf16.mxu0 0
        %997 = vmatpush1.bf16.msra.mxu0 %v969
        %998 = vmatprep.subr.bf16.mxu0 0
        %999 = vmatpush1.bf16.msra.mxu0 %v968
        %1000 = vmatprep.subr.bf16.mxu0 0
        %1001 = vmatpush2.bf16.msra.mxu0 0
        %1002 = vmatprep.subr.bf16.mxu0 0
        %1003 = vmatpush2.bf16.msra.mxu0 0
        %1004 = vmatprep.subr.bf16.mxu0 0
        %1005 = vmatpush2.bf16.msra.mxu0 0
        %1006 = vmatprep.subr.bf16.mxu0 0
        %1007 = vmatpush2.bf16.msra.mxu0 0
        %1008 = vmatprep.subr.bf16.mxu0 0
        %1009 = vmatpush2.bf16.msra.mxu0 0
        %1010 = vmatprep.subr.bf16.mxu0 0
        %1011 = vmatpush2.bf16.msra.mxu0 0
        %1012 = vmatprep.subr.bf16.mxu0 0
        %1013 = vmatpush2.bf16.msra.mxu0 0
        %1014 = vmatprep.subr.bf16.mxu0 0
        %1015 = vmatpush2.bf16.msra.mxu0 0
        %1016 = vmatprep.mubr.bf16.mxu0 0
        %1017 = vmatmul.mubr.bf16.gmra.mxu0 %v905
        %v1018 = vpop.f32.mrf.mxu0
        %v1019 = vadd.f32 %v934, %v1018
        %v1020 = vpop.f32.mrf.mxu0
        %v1021 = vpop.f32.mrf.mxu0
        %v1022 = vadd.f32 %v934, %v1021
        %v1023 = vpop.f32.mrf.mxu0
        %1024 = vmatprep.mubr.bf16.mxu0 0
        %1025 = vmatmul.mubr.bf16.gmra.mxu0 %v906
        %v1026 = vpop.f32.mrf.mxu0
        %v1027 = vadd.f32 %v934, %v1026
        %v1028 = vpop.f32.mrf.mxu0
        %v1029 = vpop.f32.mrf.mxu0
        %v1030 = vadd.f32 %v934, %v1029
        %v1031 = vpop.f32.mrf.mxu0
        %1032 = vmatprep.mubr.bf16.mxu0 0
        %1033 = vmatmul.mubr.bf16.gmra.mxu0 %v907
        %v1034 = vpop.f32.mrf.mxu0
        %v1035 = vadd.f32 %v934, %v1034
        %v1036 = vpop.f32.mrf.mxu0
        %v1037 = vpop.f32.mrf.mxu0
        %v1038 = vadd.f32 %v934, %v1037
        %v1039 = vpop.f32.mrf.mxu0
        %1040 = vmatprep.mubr.bf16.mxu0 0
        %1041 = vmatmul.mubr.bf16.gmra.mxu0 %v908
        %v1042 = vpop.f32.mrf.mxu0
        %v1043 = vadd.f32 %v934, %v1042
        %v1044 = vpop.f32.mrf.mxu0
        %v1045 = vpop.f32.mrf.mxu0
        %v1046 = vadd.f32 %v934, %v1045
        %v1047 = vpop.f32.mrf.mxu0
        %1048 = vmatprep.mubr.bf16.mxu0 0
        %1049 = vmatmul.mubr.bf16.gmra.mxu0 %v909
        %v1050 = vpop.f32.mrf.mxu0
        %v1051 = vadd.f32 %v934, %v1050
        %v1052 = vpop.f32.mrf.mxu0
        %v1053 = vpop.f32.mrf.mxu0
        %v1054 = vadd.f32 %v934, %v1053
        %v1055 = vpop.f32.mrf.mxu0
        %1056 = vmatprep.mubr.bf16.mxu0 0
        %1057 = vmatmul.mubr.bf16.gmra.mxu0 %v910
        %v1058 = vpop.f32.mrf.mxu0
        %v1059 = vadd.f32 %v934, %v1058
        %v1060 = vpop.f32.mrf.mxu0
        %v1061 = vpop.f32.mrf.mxu0
        %v1062 = vadd.f32 %v934, %v1061
        %v1063 = vpop.f32.mrf.mxu0
        %1064 = vmatprep.mubr.bf16.mxu0 0
        %1065 = vmatmul.mubr.bf16.gmra.mxu0 %v911
        %v1066 = vpop.f32.mrf.mxu0
        %v1067 = vadd.f32 %v934, %v1066
        %v1068 = vpop.f32.mrf.mxu0
        %v1069 = vpop.f32.mrf.mxu0
        %v1070 = vadd.f32 %v934, %v1069
        %v1071 = vpop.f32.mrf.mxu0
        %1072 = vmatprep.mubr.bf16.mxu0 0
        %1073 = vmatmul.mubr.bf16.gmra.mxu0 %v912
        %v1074 = vpop.f32.mrf.mxu0
        %v1075 = vadd.f32 %v934, %v1074
        %v1076 = vpop.f32.mrf.mxu0
        %v1077 = vpop.f32.mrf.mxu0
        %v1078 = vadd.f32 %v934, %v1077
        %v1079 = vpop.f32.mrf.mxu0
        %1080 = vdwg.mxu0
        %v1081 = vmax.f32 %v1019, 0.0
        %v1082 = vmax.f32 %v1022, 0.0
        %v1083 = vmax.f32 %v1027, 0.0
        %v1084 = vmax.f32 %v1030, 0.0
        %v1085 = vmax.f32 %v1035, 0.0
        %v1086 = vmax.f32 %v1038, 0.0
        %v1087 = vmax.f32 %v1043, 0.0
        %v1088 = vmax.f32 %v1046, 0.0
        %v1089 = vmax.f32 %v1051, 0.0
        %v1090 = vmax.f32 %v1054, 0.0
        %v1091 = vmax.f32 %v1059, 0.0
        %v1092 = vmax.f32 %v1062, 0.0
        %v1093 = vmax.f32 %v1067, 0.0
        %v1094 = vmax.f32 %v1070, 0.0
        %v1095 = vmax.f32 %v1075, 0.0
        %v1096 = vmax.f32 %v1078, 0.0
        %v1097 = vld [vmem:[#allocation2] sm:$0x1]
        %v1098 = vmax.f32 %v1081, %v1085
        %v1099 = vmax.f32 %v1082, %v1086
        %v1100 = vmax.f32 %v1083, %v1087
        %v1101 = vmax.f32 %v1084, %v1088
        %v1102 = vmax.f32 %v1098, %v1089
        %v1103 = vmax.f32 %v1099, %v1090
        %v1104 = vmax.f32 %v1100, %v1091
        %v1105 = vmax.f32 %v1101, %v1092
        %v1106 = vmax.f32 %v1102, %v1093
        %v1107 = vmax.f32 %v1103, %v1094
        %v1108 = vmax.f32 %v1104, %v1095
        %v1109 = vmax.f32 %v1105, %v1096
        %v1110 = vmax.f32 %v1106, %v1107
        %v1111 = vmax.f32 %v1108, %v1109
        %v1112 = vmax.f32 %v1110, %v1111
        %v1113 = vrot.slane %v1112, 4
        %v1114 = vmax.f32 %v1112, %v1113
        %v1115 = vrot.slane %v1114, 2
        %v1116 = vmax.f32 %v1114, %v1115
        %v1117 = vrot.slane %v1116, 1
        %v1118 = vmax.f32 %v1116, %v1117
        %v1119 = vmax.f32 %v1097, %v1118
        %1120 = vst [vmem:[#allocation2] sm:$0x1] %v1119
        %p1121 = scmp.eq.s32.totalorder %s28, 3
        // Predicated region
        $region61: #{tpu_custom_call.1} parent=55 // pred_check
          %p1122 = pneg %p1121
        $region62: #{tpu_custom_call.1} parent=55 // pred_check_branch
          %1124 = sbr.rel (%p1122) target = $region64
        $region63: #{tpu_custom_call.1} parent=55 // pred_region
          %v1125 = vld [vmem:[#allocation2] sm:$0x1]
          %v1126 = vpack.c.bf16 %v1125, %v1125
          %v1127 = vld [vmem:[%s7] sm:$0xf]
          %v1128 = vld [vmem:[%s7 + $0x4] sm:$0xf]
          %v1129 = vld [vmem:[%s7 + $0x8] sm:$0xf]
          %v1130 = vld [vmem:[%s7 + $0xc] sm:$0xf]
          %v1131 = vld [vmem:[%s7 + $0x10] sm:$0xf]
          %v1132 = vld [vmem:[%s7 + $0x14] sm:$0xf]
          %v1133 = vld [vmem:[%s7 + $0x18] sm:$0xf]
          %v1134 = vld [vmem:[%s7 + $0x1c] sm:$0xf]
          %v1135 = vld [vmem:[%s7 + $0x20] sm:$0xf]
          %v1136 = vld [vmem:[%s7 + $0x24] sm:$0xf]
          %v1137 = vld [vmem:[%s7 + $0x28] sm:$0xf]
          %v1138 = vld [vmem:[%s7 + $0x2c] sm:$0xf]
          %v1139 = vld [vmem:[%s7 + $0x30] sm:$0xf]
          %v1140 = vld [vmem:[%s7 + $0x34] sm:$0xf]
          %v1141 = vld [vmem:[%s7 + $0x38] sm:$0xf]
          %v1142 = vld [vmem:[%s7 + $0x3c] sm:$0xf]
          %v1143 = vld [vmem:[%s8] sm:$0x1]
          %v1160 = vunpack.c.l.b16 %v1127
          %v1161 = vunpack.c.l.b16 %v1128
          %v1162 = vunpack.c.l.b16 %v1129
          %v1163 = vunpack.c.l.b16 %v1130
          %v1164 = vunpack.c.l.b16 %v1131
          %v1165 = vunpack.c.l.b16 %v1132
          %v1166 = vunpack.c.l.b16 %v1133
          %v1167 = vunpack.c.l.b16 %v1134
          %v1168 = vunpack.c.l.b16 %v1135
          %v1169 = vunpack.c.l.b16 %v1136
          %v1170 = vunpack.c.l.b16 %v1137
          %v1171 = vunpack.c.l.b16 %v1138
          %v1172 = vunpack.c.l.b16 %v1139
          %v1173 = vunpack.c.l.b16 %v1140
          %v1174 = vunpack.c.l.b16 %v1141
          %v1175 = vunpack.c.l.b16 %v1142
          %v1176 = vpack.c.b16 %v1161, %v1160
          %v1177 = vpack.c.b16 %v1163, %v1162
          %v1178 = vpack.c.b16 %v1165, %v1164
          %v1179 = vpack.c.b16 %v1167, %v1166
          %v1180 = vpack.c.b16 %v1169, %v1168
          %v1181 = vpack.c.b16 %v1171, %v1170
          %v1182 = vpack.c.b16 %v1173, %v1172
          %v1183 = vpack.c.b16 %v1175, %v1174
          %1192 = vmatprep.subr.bf16.mxu0 0
          %1193 = vmatpush1.bf16.msra.mxu0 %v1183
          %1194 = vmatprep.subr.bf16.mxu0 0
          %1195 = vmatpush1.bf16.msra.mxu0 %v1182
          %1196 = vmatprep.subr.bf16.mxu0 0
          %1197 = vmatpush1.bf16.msra.mxu0 %v1181
          %1198 = vmatprep.subr.bf16.mxu0 0
          %1199 = vmatpush1.bf16.msra.mxu0 %v1180
          %1200 = vmatprep.subr.bf16.mxu0 0
          %1201 = vmatpush1.bf16.msra.mxu0 %v1179
          %1202 = vmatprep.subr.bf16.mxu0 0
          %1203 = vmatpush1.bf16.msra.mxu0 %v1178
          %1204 = vmatprep.subr.bf16.mxu0 0
          %1205 = vmatpush1.bf16.msra.mxu0 %v1177
          %1206 = vmatprep.subr.bf16.mxu0 0
          %1207 = vmatpush1.bf16.msra.mxu0 %v1176
          %1208 = vmatprep.subr.bf16.mxu0 0
          %1209 = vmatpush2.bf16.msra.mxu0 0
          %1210 = vmatprep.subr.bf16.mxu0 0
          %1211 = vmatpush2.bf16.msra.mxu0 0
          %1212 = vmatprep.subr.bf16.mxu0 0
          %1213 = vmatpush2.bf16.msra.mxu0 0
          %1214 = vmatprep.subr.bf16.mxu0 0
          %1215 = vmatpush2.bf16.msra.mxu0 0
          %1216 = vmatprep.subr.bf16.mxu0 0
          %1217 = vmatpush2.bf16.msra.mxu0 0
          %1218 = vmatprep.subr.bf16.mxu0 0
          %1219 = vmatpush2.bf16.msra.mxu0 0
          %1220 = vmatprep.subr.bf16.mxu0 0
          %1221 = vmatpush2.bf16.msra.mxu0 0
          %1222 = vmatprep.subr.bf16.mxu0 0
          %1223 = vmatpush2.bf16.msra.mxu0 0
          %1224 = vmatprep.mubr.bf16.mxu0 0
          %1225 = vmatmul.mubr.bf16.gmra.mxu0 %v1126
          %v1226 = vpop.f32.mrf.mxu0
          %v1227 = vadd.f32 %v1143, %v1226
          %v1228 = vpop.f32.mrf.mxu0
          %v1229 = vpop.f32.mrf.mxu0
          %v1230 = vpop.f32.mrf.mxu0
          %1231 = vdwg.mxu0
          %1232 = vst [vmem:[%s347] sm:$0x1] %v1227
        $region64: #{tpu_custom_call.1} parent=55 // pred_fallthru
          _
        %s1233 = sand.u32 %s239, 1
        %s1234 = scalar_lea.sflag [#allocation4], %s1233
        %s1235 = sand.u32 %s239, 1
        %s1236 = scalar_lea.vmem [#allocation3], %s1235
        // Predicated region
        $region65: #{tpu_custom_call.1} parent=55 // pred_check
          %p1237 = pneg %p249
        $region66: #{tpu_custom_call.1} parent=55 // pred_check_branch
          %1239 = sbr.rel (%p1237) target = $region68
        $region67: #{tpu_custom_call.1} parent=55 // pred_region
          %s1241 = ssub.s32 16, 16
          %1242 = vsyncadd %s1234, %s1241
          %s1243 = smul.addr %s27, 16
          %s1244 = scalar_lea.hbm %s9, %s1243
          %s1246 = sshll.u32 %s1236, 4
          %s1247 = int_to_ptr.vmem [resolvable:$true] %s1246
          %1249 = dma.vmem_to_hbm [thread:$0]  %s1247, 16, %s1244, %s1234
        $region68: #{tpu_custom_call.1} parent=55 // pred_fallthru
          _
      $region56: #{tpu_custom_call.1} parent=5 // pred_fallthru
        _
      %p1250 = scmp.le.s32.totalorder 2, %s18
      // Predicated region
      $region69: #{tpu_custom_call.1} parent=5 // pred_check
        %p1251 = pneg %p1250
      $region70: #{tpu_custom_call.1} parent=5 // pred_check_branch
        %1253 = sbr.rel (%p1251) target = $region72
      $region71: #{tpu_custom_call.1} parent=5 // pred_region
        %s1254 = ssub.s32 %s18, 2
        // Predicated region
        $region73: #{tpu_custom_call.1} parent=71 // pred_check
          %p1255 = pneg %p255
        $region74: #{tpu_custom_call.1} parent=71 // pred_check_branch
          %1257 = sbr.rel (%p1255) target = $region76
        $region75: #{tpu_custom_call.1} parent=71 // pred_region
          %s1258 = sand.u32 %s240, 1
          %s1259 = scalar_lea.sflag [#allocation4], %s1258
          %s1260 = sand.u32 %s240, 1
          %s1261 = scalar_lea.vmem [#allocation3], %s1260
          %1262 = dma.done %s1259, 16
        $region76: #{tpu_custom_call.1} parent=71 // pred_fallthru
          _
      $region72: #{tpu_custom_call.1} parent=5 // pred_fallthru
        _
    $region6: #{tpu_custom_call.1} parent=1 // loop_footer
      %s22 = sadd.s32 1, %s18
    $region7: #{tpu_custom_call.1} parent=1 // loop_footer_branch
      %17 = sbr.rel target = $region3
    $region8: #{tpu_custom_call.1} parent=1 // loop_exit
      _
    %1263 = vsyncpa [#allocation4], 1
    %s1264 = scalar_lea.sflag [#allocation4], 1
    %1265 = vsyncpa %s1264, 1

</llo_original>
